<compile_context>
chip_gen: v6e
topology: v6e:2x2x1
jax: 0.10.0
libtpu: 0.0.40
codegen_flags: <defaults>
</compile_context>

<pallas_src>
import functools

import jax
import jax.numpy as jnp
import numpy as np
from jax import lax
from jax.experimental import pallas as pl
from jax.experimental.pallas import tpu as pltpu

_VMEM_LIMIT = 48 * 1024 * 1024  # requested scoped VMEM; safe on v7x (64 MiB phys)
_EPS = 1e-5


# -----------------------------------------------------------------------------
# Tiling helpers
# -----------------------------------------------------------------------------
def _round_up(x, m):
    return ((x + m - 1) // m) * m


def _choose_tiles(B, K, N, out_bytes):
    """Pick (tm, tk) so the per-grid-step VMEM working set fits the budget.

    Working set (double-buffered BlockSpec pipeline):
      2 * x tile (tm, tk) bf16  +  2 * w tile (tk, N) bf16
      + 2 * out tile (tm, N)    +  acc scratch (tm, N) f32  +  LN params.
    """
    budget = int(_VMEM_LIMIT * 0.75)
    tm = min(256, _round_up(B, 8))
    tk_cands = [t for t in (512, 256, 128) if K % t == 0] or [K]
    while True:
        for tk in tk_cands:  # largest (fewest grid steps) first
            need = (2 * tm * tk * 2
                    + 2 * tk * N * 2
                    + 2 * tm * N * out_bytes
                    + tm * N * 4
                    + 6 * N * 4)
            if need <= budget:
                return tm, tk
        if tm <= 8:
            return tm, tk_cands[-1]
        tm = max(8, tm // 2)


def _pad_rows(x, rows):
    if x.shape[-2] == rows:
        return x
    pad = [(0, 0)] * x.ndim
    pad[-2] = (0, rows - x.shape[-2])
    return jnp.pad(x, pad)


def _as_bf16(v):
    return v if v.dtype == jnp.bfloat16 else v.astype(jnp.bfloat16)


# -----------------------------------------------------------------------------
# Pallas kernel bodies (shared by all layer types; blocks arrive squeezed)
# -----------------------------------------------------------------------------
def _lls_acc_kernel(x_ref, w_ref, b_ref, g_ref, beta_ref, o_ref, acc_ref,
                    *, eps, k_axis):
    """K-tiled  y = x @ W ;  epilogue: +b, LayerNorm, sigmoid."""
    k = pl.program_id(k_axis)
    nk = pl.num_programs(k_axis)

    @pl.when(k == 0)
    def _():
        acc_ref[...] = jnp.zeros_like(acc_ref)

    acc_ref[...] += jnp.dot(_as_bf16(x_ref[...]), w_ref[...],
                            preferred_element_type=jnp.float32)

    @pl.when(k == nk - 1)
    def _():
        y = acc_ref[...] + b_ref[...]
        mean = jnp.mean(y, axis=-1, keepdims=True)
        var = jnp.mean(y * y, axis=-1, keepdims=True) - mean * mean
        yn = (y - mean) * lax.rsqrt(var + eps) * g_ref[...] + beta_ref[...]
        o_ref[...] = jax.nn.sigmoid(yn).astype(o_ref.dtype)


def _linear_acc_kernel(x_ref, w_ref, b_ref, o_ref, acc_ref, *, k_axis):
    """K-tiled plain linear  y = x @ W + b  (output heads)."""
    k = pl.program_id(k_axis)
    nk = pl.num_programs(k_axis)

    @pl.when(k == 0)
    def _():
        acc_ref[...] = jnp.zeros_like(acc_ref)

    acc_ref[...] += jnp.dot(_as_bf16(x_ref[...]), w_ref[...],
                            preferred_element_type=jnp.float32)

    @pl.when(k == nk - 1)
    def _():
        o_ref[...] = (acc_ref[...] + b_ref[...]).astype(o_ref.dtype)


# -----------------------------------------------------------------------------
# pallas_call wrappers
# -----------------------------------------------------------------------------
def fused_input_lls(src, w, b, g, beta, eps=_EPS):
    """7 input Linear+LN+Sigmoid layers in one call.

    src: [M, B, K] (bf16)   w: [M, K, H] (bf16)   b/g/beta: [M, 1, H] (f32)
    Returns the concatenated activation directly: [B, M*H] bf16.
    """
    M, B, K = src.shape
    H = w.shape[-1]
    tm, tk = _choose_tiles(B, K, H, out_bytes=2)
    Bp = _round_up(B, tm)
    src = _pad_rows(src, Bp)

    out = pl.pallas_call(
        functools.partial(_lls_acc_kernel, eps=eps, k_axis=2),
        out_shape=jax.ShapeDtypeStruct((Bp, M * H), jnp.bfloat16),
        grid=(M, Bp // tm, K // tk),
        in_specs=[
            pl.BlockSpec((None, tm, tk), lambda m, i, k: (m, i, k)),
            pl.BlockSpec((None, tk, H), lambda m, i, k: (m, k, 0)),
            pl.BlockSpec((None, 1, H), lambda m, i, k: (m, 0, 0)),
            pl.BlockSpec((None, 1, H), lambda m, i, k: (m, 0, 0)),
            pl.BlockSpec((None, 1, H), lambda m, i, k: (m, 0, 0)),
        ],
        out_specs=pl.BlockSpec((tm, H), lambda m, i, k: (i, m)),
        scratch_shapes=[pltpu.VMEM((tm, H), jnp.float32)],
        compiler_params=pltpu.CompilerParams(
            dimension_semantics=("parallel", "parallel", "arbitrary"),
            vmem_limit_bytes=_VMEM_LIMIT),
    )(src, w, b, g, beta)
    return out[:B]


def linear_ln_sigmoid(x, w, b, g, beta, eps=_EPS):
    """K-tiled Linear + LayerNorm + Sigmoid (hidden layers).

    x: [B, K] (bf16)   w: [K, N] (bf16)   b/g/beta: [N] (f32)   ->  [B, N] bf16
    """
    B, K = x.shape
    N = w.shape[1]
    tm, tk = _choose_tiles(B, K, N, out_bytes=2)
    Bp = _round_up(B, tm)
    x = _pad_rows(x, Bp)

    out = pl.pallas_call(
        functools.partial(_lls_acc_kernel, eps=eps, k_axis=1),
        out_shape=jax.ShapeDtypeStruct((Bp, N), jnp.bfloat16),
        grid=(Bp // tm, K // tk),
        in_specs=[
            pl.BlockSpec((tm, tk), lambda i, k: (i, k)),
            pl.BlockSpec((tk, N), lambda i, k: (k, 0)),
            pl.BlockSpec((1, N), lambda i, k: (0, 0)),
            pl.BlockSpec((1, N), lambda i, k: (0, 0)),
            pl.BlockSpec((1, N), lambda i, k: (0, 0)),
        ],
        out_specs=pl.BlockSpec((tm, N), lambda i, k: (i, 0)),
        scratch_shapes=[pltpu.VMEM((tm, N), jnp.float32)],
        compiler_params=pltpu.CompilerParams(
            dimension_semantics=("parallel", "arbitrary"),
            vmem_limit_bytes=_VMEM_LIMIT),
    )(x, w, b.reshape(1, N), g.reshape(1, N), beta.reshape(1, N))
    return out[:B]


def fused_output_heads(x, w, b):
    """7 output heads in one call, reading the h-slices of x via the index_map.

    x: [B, M*H] (bf16)   w: [M, H, D] (bf16)   b: [M, 1, D] (f32)
    Returns one lane-dense slab [B, M*D] f32 (split outside).
    """
    B, MH = x.shape
    M, H, D = w.shape
    assert MH == M * H
    tm, tk = _choose_tiles(B, H, D, out_bytes=4)
    Bp = _round_up(B, tm)
    x = _pad_rows(x, Bp)
    nkpm = H // tk  # K-tiles per modality

    out = pl.pallas_call(
        functools.partial(_linear_acc_kernel, k_axis=2),
        out_shape=jax.ShapeDtypeStruct((Bp, M * D), jnp.float32),
        grid=(M, Bp // tm, nkpm),
        in_specs=[
            pl.BlockSpec((tm, tk), lambda m, i, k: (i, m * nkpm + k)),
            pl.BlockSpec((None, tk, D), lambda m, i, k: (m, k, 0)),
            pl.BlockSpec((None, 1, D), lambda m, i, k: (m, 0, 0)),
        ],
        out_specs=pl.BlockSpec((tm, D), lambda m, i, k: (i, m)),
        scratch_shapes=[pltpu.VMEM((tm, D), jnp.float32)],
        compiler_params=pltpu.CompilerParams(
            dimension_semantics=("parallel", "parallel", "arbitrary"),
            vmem_limit_bytes=_VMEM_LIMIT),
    )(x, w, b)
    return out[:B]


# -----------------------------------------------------------------------------
# Parameter construction (PyTorch-style Linear init; weights in bf16)
# -----------------------------------------------------------------------------
def _init_linear(key, in_dim, out_dim):
    kw, kb = jax.random.split(key)
    bound = 1.0 / np.sqrt(in_dim)
    w = jax.random.uniform(kw, (in_dim, out_dim), jnp.float32, -bound, bound)
    b = jax.random.uniform(kb, (out_dim,), jnp.float32, -bound, bound)
    return w.astype(jnp.bfloat16), b


def init_mda_params(key, input_dim, h, h_big, bottleneck, n_modal=7):
    keys = iter(jax.random.split(key, 2 * n_modal + 4))

    # Stacked per-modality input layers.
    iw, ib = zip(*[_init_linear(next(keys), input_dim, h) for _ in range(n_modal)])
    inp = {
        "w": jnp.stack(iw),                                   # [M, K, H] bf16
        "b": jnp.stack(ib)[:, None, :],                       # [M, 1, H]
        "g": jnp.ones((n_modal, 1, h), jnp.float32),
        "beta": jnp.zeros((n_modal, 1, h), jnp.float32),
    }

    def lls(key, k_dim, n_dim):
        w, b = _init_linear(key, k_dim, n_dim)
        return {"w": w, "b": b,
                "g": jnp.ones((n_dim,), jnp.float32),
                "beta": jnp.zeros((n_dim,), jnp.float32)}

    hidden1 = [lls(next(keys), h * n_modal, h_big), lls(next(keys), h_big, bottleneck)]
    hidden2 = [lls(next(keys), bottleneck, h_big), lls(next(keys), h_big, h * n_modal)]

    # Stacked output heads.
    ow, ob = zip(*[_init_linear(next(keys), h, input_dim) for _ in range(n_modal)])
    outp = {"w": jnp.stack(ow),                               # [M, H, D] bf16
            "b": jnp.stack(ob)[:, None, :]}                   # [M, 1, D]

    return {"input": inp, "hidden1": hidden1, "hidden2": hidden2, "output": outp}


# -----------------------------------------------------------------------------
# Forward pass (mirrors build_MDA_encoder.forward; dropout = identity)
# -----------------------------------------------------------------------------
def mda_encoder_forward(src, params, n_modal=7):
    src = src.astype(jnp.bfloat16)
    pin = params["input"]
    x = fused_input_lls(src, pin["w"], pin["b"], pin["g"], pin["beta"])  # [B, M*H] bf16

    for p in params["hidden1"]:
        x = linear_ln_sigmoid(x, p["w"], p["b"], p["g"], p["beta"])
    hs = x.astype(jnp.float32)                                           # bottleneck

    for p in params["hidden2"]:
        x = linear_ln_sigmoid(x, p["w"], p["b"], p["g"], p["beta"])

    pout = params["output"]
    rec_slab = fused_output_heads(x, pout["w"], pout["b"])               # [B, M*D] f32
    D = pout["w"].shape[-1]
    rec = [rec_slab[:, i * D:(i + 1) * D] for i in range(n_modal)]
    return rec, hs


# -----------------------------------------------------------------------------
# Pure-JAX reference (same bf16 weight/activation casts) for correctness check
# -----------------------------------------------------------------------------
def _ref_lls(x, w, b, g, beta, eps=_EPS):
    y = jnp.dot(x, w, preferred_element_type=jnp.float32) + b
    m = jnp.mean(y, axis=-1, keepdims=True)
    v = jnp.mean(y * y, axis=-1, keepdims=True) - m * m
    yn = (y - m) * lax.rsqrt(v + eps) * g + beta
    return jax.nn.sigmoid(yn).astype(jnp.bfloat16)


def mda_encoder_ref(src, params, h, n_modal=7):
    src = src.astype(jnp.bfloat16)
    pin = params["input"]
    outs = [_ref_lls(src[i], pin["w"][i], pin["b"][i], pin["g"][i], pin["beta"][i])
            for i in range(n_modal)]
    x = jnp.concatenate(outs, axis=1)
    for p in params["hidden1"]:
        x = _ref_lls(x, p["w"], p["b"], p["g"], p["beta"])
    hs = x.astype(jnp.float32)
    for p in params["hidden2"]:
        x = _ref_lls(x, p["w"], p["b"], p["g"], p["beta"])
    pout = params["output"]
    rec = [jnp.dot(x[:, i * h:(i + 1) * h], pout["w"][i],
                   preferred_element_type=jnp.float32) + pout["b"][i]
           for i in range(n_modal)]
    return rec, hs


# -----------------------------------------------------------------------------
if __name__ == "__main__":
    # Scaled-down, TPU-tile-friendly stand-ins for the module's hardcoded sizes:
    #   2500 -> H=256, 9000 -> H_BIG=512, 1200 -> BOTTLENECK=128, input_dim=128.
    N_MODAL = 7
    INPUT_DIM = 128
    H = 256
    H_BIG = 512
    BOTTLENECK = 128
    BATCH = 8

    key = jax.random.PRNGKey(0)
    k_src, k_par = jax.random.split(key)
    src = jax.random.normal(k_src, (N_MODAL, BATCH, INPUT_DIM), jnp.float32)
    params = init_mda_params(k_par, INPUT_DIM, H, H_BIG, BOTTLENECK, N_MODAL)

    rec, hs = mda_encoder_forward(src, params, N_MODAL)
    rec = [jax.block_until_ready(r) for r in rec]
    hs = jax.block_until_ready(hs)

    # Correctness check against a plain-JAX reference (same bf16 casts).
    rec_ref, hs_ref = mda_encoder_ref(src, params, H, N_MODAL)
    assert hs.shape == (BATCH, BOTTLENECK)
    np.testing.assert_allclose(np.asarray(hs, dtype=np.float32),
                               np.asarray(hs_ref, dtype=np.float32),
                               rtol=1e-2, atol=1e-2)
    for r, rr in zip(rec, rec_ref):
        assert r.shape == (BATCH, INPUT_DIM)
        np.testing.assert_allclose(np.asarray(r, dtype=np.float32),
                                   np.asarray(rr, dtype=np.float32),
                                   rtol=1e-2, atol=1e-2)

    print("KERNEL_OK")
</pallas_src>

<mosaic_0001>
module attributes {stable_mosaic.version = 11 : i64} {
  func.func @_lls_acc_kernel(%arg0: i32, %arg1: i32, %arg2: i32, %arg3: memref<1x8x128xbf16, #tpu.memory_space<vmem>>, %arg4: memref<1x128x256xbf16, #tpu.memory_space<vmem>>, %arg5: memref<1x1x256xf32, #tpu.memory_space<vmem>>, %arg6: memref<1x1x256xf32, #tpu.memory_space<vmem>>, %arg7: memref<1x1x256xf32, #tpu.memory_space<vmem>>, %arg8: memref<8x256xbf16, #tpu.memory_space<vmem>>, %arg9: memref<8x256xf32, #tpu.memory_space<vmem>>) attributes {dimension_semantics = [#tpu.dimension_semantics<parallel>, #tpu.dimension_semantics<parallel>, #tpu.dimension_semantics<arbitrary>], iteration_bounds = array<i64: 7, 1, 1>, scalar_prefetch = 0 : i64, scratch_operands = 1 : i64, tpu.core_type = #tpu.core_type<tc>, window_params = [{transform_indices = @transform_0, window_bounds = array<i64: 1, 8, 128>}, {transform_indices = @transform_1, window_bounds = array<i64: 1, 128, 256>}, {transform_indices = @transform_2, window_bounds = array<i64: 1, 1, 256>}, {transform_indices = @transform_3, window_bounds = array<i64: 1, 1, 256>}, {transform_indices = @transform_4, window_bounds = array<i64: 1, 1, 256>}, {transform_indices = @transform_5, window_bounds = array<i64: 8, 256>}]} {
    %c0_i32 = arith.constant 0 : i32
    %0 = arith.cmpi eq, %arg2, %c0_i32 : i32
    %1 = arith.extui %0 : i1 to i32
    %c0_i32_0 = arith.constant 0 : i32
    %2 = arith.cmpi ne, %1, %c0_i32_0 : i32
    scf.if %2 {
      %cst_12 = arith.constant 0.000000e+00 : f32
      %14 = vector.broadcast %cst_12 : f32 to vector<8x256xf32>
      %c0_13 = arith.constant 0 : index
      %c0_14 = arith.constant 0 : index
      %15 = vector.load %arg9[%c0_13, %c0_14] : memref<8x256xf32, #tpu.memory_space<vmem>>, vector<8x256xf32>
      tpu.vector_store %arg9[%c0_13, %c0_14], %14 {strides = array<i32>} : memref<8x256xf32, #tpu.memory_space<vmem>>, vector<8x256xf32>,
    } else {
    }
    %c0 = arith.constant 0 : index
    %c0_1 = arith.constant 0 : index
    %3 = vector.load %arg9[%c0, %c0_1] : memref<8x256xf32, #tpu.memory_space<vmem>>, vector<8x256xf32>
    %c0_2 = arith.constant 0 : index
    %c0_3 = arith.constant 0 : index
    %c0_4 = arith.constant 0 : index
    %4 = vector.load %arg3[%c0_2, %c0_3, %c0_4] : memref<1x8x128xbf16, #tpu.memory_space<vmem>>, vector<1x8x128xbf16>
    %5 = vector.shape_cast %4 : vector<1x8x128xbf16> to vector<8x128xbf16>
    %c0_5 = arith.constant 0 : index
    %c0_6 = arith.constant 0 : index
    %c0_7 = arith.constant 0 : index
    %6 = vector.load %arg4[%c0_5, %c0_6, %c0_7] : memref<1x128x256xbf16, #tpu.memory_space<vmem>>, vector<1x128x256xbf16>
    %7 = vector.shape_cast %6 : vector<1x128x256xbf16> to vector<128x256xbf16>
    %cst = arith.constant dense<0.000000e+00> : vector<8x256xf32>
    %8 = tpu.matmul %5, %7, %cst {dimension_numbers = #tpu.dot_dimension_numbers<[1], [0], [0], [1], [0, 0, 1, 1], [], []>} : vector<8x128xbf16>, vector<128x256xbf16>, vector<8x256xf32> -> vector<8x256xf32>
    %9 = arith.addf %3, %8 : vector<8x256xf32>
    %c0_8 = arith.constant 0 : index
    %c0_9 = arith.constant 0 : index
    %10 = vector.load %arg9[%c0_8, %c0_9] : memref<8x256xf32, #tpu.memory_space<vmem>>, vector<8x256xf32>
    tpu.vector_store %arg9[%c0_8, %c0_9], %9 {strides = array<i32>} : memref<8x256xf32, #tpu.memory_space<vmem>>, vector<8x256xf32>,
    %c0_i32_10 = arith.constant 0 : i32
    %11 = arith.cmpi eq, %arg2, %c0_i32_10 : i32
    %12 = arith.extui %11 : i1 to i32
    %c0_i32_11 = arith.constant 0 : i32
    %13 = arith.cmpi ne, %12, %c0_i32_11 : i32
    scf.if %13 {
      %c0_12 = arith.constant 0 : index
      %c0_13 = arith.constant 0 : index
      %14 = vector.load %arg9[%c0_12, %c0_13] : memref<8x256xf32, #tpu.memory_space<vmem>>, vector<8x256xf32>
      %c0_14 = arith.constant 0 : index
      %c0_15 = arith.constant 0 : index
      %c0_16 = arith.constant 0 : index
      %15 = vector.load %arg5[%c0_14, %c0_15, %c0_16] : memref<1x1x256xf32, #tpu.memory_space<vmem>>, vector<1x1x256xf32>
      %16 = vector.shape_cast %15 : vector<1x1x256xf32> to vector<1x256xf32>
      %17 = vector.broadcast %16 : vector<1x256xf32> to vector<8x256xf32>
      %18 = arith.addf %14, %17 : vector<8x256xf32>
      %cst_17 = arith.constant dense<0.000000e+00> : vector<8xf32>
      %19 = vector.multi_reduction <add>, %18, %cst_17 [1] : vector<8x256xf32> to vector<8xf32>
      %20 = vector.shape_cast %19 : vector<8xf32> to vector<8x1xf32>
      %cst_18 = arith.constant 2.560000e+02 : f32
      %21 = vector.broadcast %cst_18 : f32 to vector<8x1xf32>
      %22 = arith.divf %20, %21 : vector<8x1xf32>
      %23 = arith.mulf %18, %18 : vector<8x256xf32>
      %cst_19 = arith.constant dense<0.000000e+00> : vector<8xf32>
      %24 = vector.multi_reduction <add>, %23, %cst_19 [1] : vector<8x256xf32> to vector<8xf32>
      %25 = vector.shape_cast %24 : vector<8xf32> to vector<8x1xf32>
      %cst_20 = arith.constant 2.560000e+02 : f32
      %26 = vector.broadcast %cst_20 : f32 to vector<8x1xf32>
      %27 = arith.divf %25, %26 : vector<8x1xf32>
      %28 = arith.mulf %22, %22 : vector<8x1xf32>
      %29 = arith.subf %27, %28 : vector<8x1xf32>
      %30 = vector.broadcast %22 : vector<8x1xf32> to vector<8x256xf32>
      %31 = arith.subf %18, %30 : vector<8x256xf32>
      %cst_21 = arith.constant 9.99999974E-6 : f32
      %32 = vector.broadcast %cst_21 : f32 to vector<8x1xf32>
      %33 = arith.addf %29, %32 : vector<8x1xf32>
      %34 = math.rsqrt %33 : vector<8x1xf32>
      %35 = vector.broadcast %34 : vector<8x1xf32> to vector<8x256xf32>
      %36 = arith.mulf %31, %35 : vector<8x256xf32>
      %c0_22 = arith.constant 0 : index
      %c0_23 = arith.constant 0 : index
      %c0_24 = arith.constant 0 : index
      %37 = vector.load %arg6[%c0_22, %c0_23, %c0_24] : memref<1x1x256xf32, #tpu.memory_space<vmem>>, vector<1x1x256xf32>
      %38 = vector.shape_cast %37 : vector<1x1x256xf32> to vector<1x256xf32>
      %39 = vector.broadcast %38 : vector<1x256xf32> to vector<8x256xf32>
      %40 = arith.mulf %36, %39 : vector<8x256xf32>
      %c0_25 = arith.constant 0 : index
      %c0_26 = arith.constant 0 : index
      %c0_27 = arith.constant 0 : index
      %41 = vector.load %arg7[%c0_25, %c0_26, %c0_27] : memref<1x1x256xf32, #tpu.memory_space<vmem>>, vector<1x1x256xf32>
      %42 = vector.shape_cast %41 : vector<1x1x256xf32> to vector<1x256xf32>
      %43 = vector.broadcast %42 : vector<1x256xf32> to vector<8x256xf32>
      %44 = arith.addf %40, %43 : vector<8x256xf32>
      %45 = arith.negf %44 : vector<8x256xf32>
      %46 = math.exp %45 : vector<8x256xf32>
      %cst_28 = arith.constant 1.000000e+00 : f32
      %47 = vector.broadcast %cst_28 : f32 to vector<8x256xf32>
      %48 = arith.addf %47, %46 : vector<8x256xf32>
      %49 = arith.divf %47, %48 : vector<8x256xf32>
      %50 = arith.truncf %49 : vector<8x256xf32> to vector<8x256xbf16>
      %c0_29 = arith.constant 0 : index
      %c0_30 = arith.constant 0 : index
      %51 = vector.load %arg8[%c0_29, %c0_30] : memref<8x256xbf16, #tpu.memory_space<vmem>>, vector<8x256xbf16>
      tpu.vector_store %arg8[%c0_29, %c0_30], %50 {strides = array<i32>} : memref<8x256xbf16, #tpu.memory_space<vmem>>, vector<8x256xbf16>,
    } else {
    }
    return
  }
  func.func @transform_0(%arg0: i32, %arg1: i32, %arg2: i32) -> (i32, i32, i32) {
    %c0_i32 = arith.constant 0 : i32
    return %arg0, %arg1, %arg2 : i32, i32, i32
  }
  func.func @transform_1(%arg0: i32, %arg1: i32, %arg2: i32) -> (i32, i32, i32) {
    %c0_i32 = arith.constant 0 : i32
    %c0_i32_0 = arith.constant 0 : i32
    return %arg0, %arg2, %c0_i32 : i32, i32, i32
  }
  func.func @transform_2(%arg0: i32, %arg1: i32, %arg2: i32) -> (i32, i32, i32) {
    %c0_i32 = arith.constant 0 : i32
    %c0_i32_0 = arith.constant 0 : i32
    %c0_i32_1 = arith.constant 0 : i32
    return %arg0, %c0_i32, %c0_i32_0 : i32, i32, i32
  }
  func.func @transform_3(%arg0: i32, %arg1: i32, %arg2: i32) -> (i32, i32, i32) {
    %c0_i32 = arith.constant 0 : i32
    %c0_i32_0 = arith.constant 0 : i32
    %c0_i32_1 = arith.constant 0 : i32
    return %arg0, %c0_i32, %c0_i32_0 : i32, i32, i32
  }
  func.func @transform_4(%arg0: i32, %arg1: i32, %arg2: i32) -> (i32, i32, i32) {
    %c0_i32 = arith.constant 0 : i32
    %c0_i32_0 = arith.constant 0 : i32
    %c0_i32_1 = arith.constant 0 : i32
    return %arg0, %c0_i32, %c0_i32_0 : i32, i32, i32
  }
  func.func @transform_5(%arg0: i32, %arg1: i32, %arg2: i32) -> (i32, i32) {
    %c0_i32 = arith.constant 0 : i32
    return %arg1, %arg0 : i32, i32
  }
}

</mosaic_0001>

<llo_original>
// kernel: tpu_custom_call.1
$region0: #{tpu_custom_call.1}
  #allocation0 [shape = 'u32[]', space=smem, size = 0x4, offset = 0x4, fixed_abs, tag = 'smem constant byte address 0x4 - core index']
  #allocation1 [shape = 'u32[144,128]{1,0:T(1,128)}', space=vmem, size = 0x12000, scoped, tag = 'internal scratch']
  #allocation2 [shape = 'f32[8,256]{1,0:T(8,128)}', space=vmem, size = 0x2000, scoped, tag = 'scratch operand']
  %s0 = inlined_call_operand.hbm [shape: bf16[7,8,128], index: 0, kind: input, shape index: {}]
  %s1 = inlined_call_operand.hbm [shape: bf16[7,128,256], index: 1, kind: input, shape index: {}]
  %s2 = inlined_call_operand.hbm [shape: f32[7,1,256], index: 2, kind: input, shape index: {}]
  %s3 = inlined_call_operand.hbm [shape: f32[7,1,256], index: 3, kind: input, shape index: {}]
  %s4 = inlined_call_operand.hbm [shape: f32[7,1,256], index: 4, kind: input, shape index: {}]
  %s5 = inlined_call_operand.hbm [shape: bf16[8,1792], index: 5, kind: output, shape index: {}]
  %s6 = sld [smem:[#allocation0]]
  $region81: #{tpu_custom_call.1} parent=0
    _
  %s8 = ssub.s32 1, %s6
  %s9 = scalar_select 0, %s8, %s6
  $region1: #{tpu_custom_call.1} parent=0
    #allocation3 [shape = 'u8[4096]{0}', space=vmem, size = 0x1000, scoped, tag = 'input window, operand 0']
    #allocation4 [shape = 's32[2]{0}', space=sflag, size = 0x8, scoped, tag = 'scoped memory for tpu_custom_call.1']
    #allocation5 [shape = 's32[2]{0}', space=sflag, size = 0x8, scoped, tag = 'scoped memory for tpu_custom_call.1']
    #allocation6 [shape = 'u8[131072]{0}', space=vmem, size = 0x20000, scoped, tag = 'input window, operand 1']
    #allocation7 [shape = 's32[2]{0}', space=sflag, size = 0x8, scoped, tag = 'scoped memory for tpu_custom_call.1']
    #allocation8 [shape = 'u8[2048]{0}', space=vmem, size = 0x800, scoped, tag = 'input window, operand 2']
    #allocation9 [shape = 'u8[2048]{0}', space=vmem, size = 0x800, scoped, tag = 'input window, operand 3']
    #allocation10 [shape = 's32[2]{0}', space=sflag, size = 0x8, scoped, tag = 'scoped memory for tpu_custom_call.1']
    #allocation11 [shape = 'u8[2048]{0}', space=vmem, size = 0x800, scoped, tag = 'input window, operand 4']
    #allocation12 [shape = 'u8[8192]{0}', space=vmem, size = 0x2000, scoped, tag = 'output window, operand 0']
    %10 = vsyncpa [#allocation4], 0
    %s11 = scalar_lea.sflag [#allocation4], 1
    %12 = vsyncpa %s11, 0
    %13 = vsyncpa [#allocation7], 0
    %s14 = scalar_lea.sflag [#allocation7], 1
    %15 = vsyncpa %s14, 0
    %16 = vsyncpa [#allocation10], 0
    %s17 = scalar_lea.sflag [#allocation10], 1
    %18 = vsyncpa %s17, 0
    %19 = vsyncpa [#allocation5], 0
    %s20 = scalar_lea.sflag [#allocation5], 1
    %21 = vsyncpa %s20, 0
    loop: start=0, step=1, limit=9
    $region2: #{tpu_custom_call.1} parent=1 // loop_pre_header
      _
    $region3: #{tpu_custom_call.1} parent=1 // loop_header
      %s23 = sphi 0, %s27
      %p24 = scmp.ge.s32.totalorder %s23, 9
      %s30 = sphi 0, %s49
      %s31 = sphi 0, %s45
      %s32 = sphi 0, %s41
      %s33 = sphi 0, %s30
      %s34 = sphi 0, %s31
      %s35 = sphi 0, %s32
      %s36 = sphi 0, %s33
      %s37 = sphi 0, %s34
      %s38 = sphi 0, %s35
      %s56 = sphi 0, %s58
      %s59 = sphi 0, %s56
      %s60 = sphi 0, %s59
      %s76 = sphi 0, %s60
      %s84 = sphi 0, %s86
      %s87 = sphi 0, %s84
      %s88 = sphi 0, %s87
      %s104 = sphi 0, %s88
      %s110 = sphi 0, %s112
      %s113 = sphi 0, %s110
      %s114 = sphi 0, %s113
      %s130 = sphi 0, %s114
      %s136 = sphi 0, %s138
      %s139 = sphi 0, %s136
      %s140 = sphi 0, %s139
      %s156 = sphi 0, %s140
      %s162 = sphi 0, %s164
      %s165 = sphi 0, %s162
      %s166 = sphi 0, %s165
      %s182 = sphi 0, %s166
      %s190 = sphi 0, %s192
      %s193 = sphi 0, %s190
      %s194 = sphi 0, %s193
      %s210 = sphi 0, %s194
    $region4: #{tpu_custom_call.1} parent=1 // loop_header_branch
      %26 = sbr.rel (%p24) target = $region8
    $region5: #{tpu_custom_call.1} parent=1 // loop_body
      %s28 = ssub.s32 %s23, 1
      %s29 = ssub.s32 %s23, 2
      %s39 = sadd.s32 1, %s32
      %p40 = scmp.ge.s32.totalorder %s39, 1
      %s41 = scalar_select %p40, 0, %s39
      %s42 = sadd.s32 1, %s31
      %s43 = scalar_select %p40, %s42, %s31
      %p44 = scmp.ge.s32.totalorder %s43, 1
      %s45 = scalar_select %p44, 0, %s43
      %s46 = sadd.s32 1, %s30
      %s47 = scalar_select %p44, %s46, %s30
      %p48 = scmp.ge.s32.totalorder %s47, 7
      %s49 = scalar_select %p48, 0, %s47
      %s50 = ssub.s32 %s30, %s49
      %s51 = ssub.s32 %s31, %s45
      %s52 = sor.u32 %s50, %s51
      %s53 = ssub.s32 %s32, %s41
      %s54 = sor.u32 %s52, %s53
      %p55 = scmp.eq.s32.totalorder %s54, 0
      %s57 = sadd.s32 %s56, 1
      %s58 = scalar_select %p55, %s56, %s57
      %p61 = pneg %p55
      %p62 = scmp.eq.s32.totalorder %s23, 6
      %p63 = por %p61, %p62
      %p64 = scmp.ne.s32.totalorder %s56, %s59
      %p65 = scmp.eq.s32.totalorder %s23, 0
      %p66 = por %p64, %p65
      %p67 = scmp.ne.s32.totalorder %s56, %s59
      %p68 = scmp.eq.s32.totalorder %s28, 6
      %p69 = por %p67, %p68
      %p70 = scmp.ne.s32.totalorder %s59, %s60
      %p71 = scmp.eq.s32.totalorder %s28, 0
      %p72 = por %p70, %p71
      %p73 = scmp.ne.s32.totalorder %s59, %s60
      %p74 = scmp.eq.s32.totalorder %s29, 6
      %p75 = por %p73, %p74
      %p77 = scmp.ne.s32.totalorder %s60, %s76
      %p78 = scmp.eq.s32.totalorder %s29, 0
      %p79 = por %p77, %p78
      %s80 = ssub.s32 %s30, %s49
      %s81 = ssub.s32 %s32, %s41
      %s82 = sor.u32 %s80, %s81
      %p83 = scmp.eq.s32.totalorder %s82, 0
      %s85 = sadd.s32 %s84, 1
      %s86 = scalar_select %p83, %s84, %s85
      %p89 = pneg %p83
      %p90 = scmp.eq.s32.totalorder %s23, 6
      %p91 = por %p89, %p90
      %p92 = scmp.ne.s32.totalorder %s84, %s87
      %p93 = scmp.eq.s32.totalorder %s23, 0
      %p94 = por %p92, %p93
      %p95 = scmp.ne.s32.totalorder %s84, %s87
      %p96 = scmp.eq.s32.totalorder %s28, 6
      %p97 = por %p95, %p96
      %p98 = scmp.ne.s32.totalorder %s87, %s88
      %p99 = scmp.eq.s32.totalorder %s28, 0
      %p100 = por %p98, %p99
      %p101 = scmp.ne.s32.totalorder %s87, %s88
      %p102 = scmp.eq.s32.totalorder %s29, 6
      %p103 = por %p101, %p102
      %p105 = scmp.ne.s32.totalorder %s88, %s104
      %p106 = scmp.eq.s32.totalorder %s29, 0
      %p107 = por %p105, %p106
      %s108 = ssub.s32 %s30, %s49
      %p109 = scmp.eq.s32.totalorder %s108, 0
      %s111 = sadd.s32 %s110, 1
      %s112 = scalar_select %p109, %s110, %s111
      %p115 = pneg %p109
      %p116 = scmp.eq.s32.totalorder %s23, 6
      %p117 = por %p115, %p116
      %p118 = scmp.ne.s32.totalorder %s110, %s113
      %p119 = scmp.eq.s32.totalorder %s23, 0
      %p120 = por %p118, %p119
      %p121 = scmp.ne.s32.totalorder %s110, %s113
      %p122 = scmp.eq.s32.totalorder %s28, 6
      %p123 = por %p121, %p122
      %p124 = scmp.ne.s32.totalorder %s113, %s114
      %p125 = scmp.eq.s32.totalorder %s28, 0
      %p126 = por %p124, %p125
      %p127 = scmp.ne.s32.totalorder %s113, %s114
      %p128 = scmp.eq.s32.totalorder %s29, 6
      %p129 = por %p127, %p128
      %p131 = scmp.ne.s32.totalorder %s114, %s130
      %p132 = scmp.eq.s32.totalorder %s29, 0
      %p133 = por %p131, %p132
      %s134 = ssub.s32 %s30, %s49
      %p135 = scmp.eq.s32.totalorder %s134, 0
      %s137 = sadd.s32 %s136, 1
      %s138 = scalar_select %p135, %s136, %s137
      %p141 = pneg %p135
      %p142 = scmp.eq.s32.totalorder %s23, 6
      %p143 = por %p141, %p142
      %p144 = scmp.ne.s32.totalorder %s136, %s139
      %p145 = scmp.eq.s32.totalorder %s23, 0
      %p146 = por %p144, %p145
      %p147 = scmp.ne.s32.totalorder %s136, %s139
      %p148 = scmp.eq.s32.totalorder %s28, 6
      %p149 = por %p147, %p148
      %p150 = scmp.ne.s32.totalorder %s139, %s140
      %p151 = scmp.eq.s32.totalorder %s28, 0
      %p152 = por %p150, %p151
      %p153 = scmp.ne.s32.totalorder %s139, %s140
      %p154 = scmp.eq.s32.totalorder %s29, 6
      %p155 = por %p153, %p154
      %p157 = scmp.ne.s32.totalorder %s140, %s156
      %p158 = scmp.eq.s32.totalorder %s29, 0
      %p159 = por %p157, %p158
      %s160 = ssub.s32 %s30, %s49
      %p161 = scmp.eq.s32.totalorder %s160, 0
      %s163 = sadd.s32 %s162, 1
      %s164 = scalar_select %p161, %s162, %s163
      %p167 = pneg %p161
      %p168 = scmp.eq.s32.totalorder %s23, 6
      %p169 = por %p167, %p168
      %p170 = scmp.ne.s32.totalorder %s162, %s165
      %p171 = scmp.eq.s32.totalorder %s23, 0
      %p172 = por %p170, %p171
      %p173 = scmp.ne.s32.totalorder %s162, %s165
      %p174 = scmp.eq.s32.totalorder %s28, 6
      %p175 = por %p173, %p174
      %p176 = scmp.ne.s32.totalorder %s165, %s166
      %p177 = scmp.eq.s32.totalorder %s28, 0
      %p178 = por %p176, %p177
      %p179 = scmp.ne.s32.totalorder %s165, %s166
      %p180 = scmp.eq.s32.totalorder %s29, 6
      %p181 = por %p179, %p180
      %p183 = scmp.ne.s32.totalorder %s166, %s182
      %p184 = scmp.eq.s32.totalorder %s29, 0
      %p185 = por %p183, %p184
      %s186 = ssub.s32 %s31, %s45
      %s187 = ssub.s32 %s30, %s49
      %s188 = sor.u32 %s186, %s187
      %p189 = scmp.eq.s32.totalorder %s188, 0
      %s191 = sadd.s32 %s190, 1
      %s192 = scalar_select %p189, %s190, %s191
      %p195 = pneg %p189
      %p196 = scmp.eq.s32.totalorder %s23, 6
      %p197 = por %p195, %p196
      %p198 = scmp.ne.s32.totalorder %s190, %s193
      %p199 = scmp.eq.s32.totalorder %s23, 0
      %p200 = por %p198, %p199
      %p201 = scmp.ne.s32.totalorder %s190, %s193
      %p202 = scmp.eq.s32.totalorder %s28, 6
      %p203 = por %p201, %p202
      %p204 = scmp.ne.s32.totalorder %s193, %s194
      %p205 = scmp.eq.s32.totalorder %s28, 0
      %p206 = por %p204, %p205
      %p207 = scmp.ne.s32.totalorder %s193, %s194
      %p208 = scmp.eq.s32.totalorder %s29, 6
      %p209 = por %p207, %p208
      %p211 = scmp.ne.s32.totalorder %s194, %s210
      %p212 = scmp.eq.s32.totalorder %s29, 0
      %p213 = por %p211, %p212
      %p214 = scmp.le.s32.totalorder 1, %s23
      %p215 = scmp.lt.s32.totalorder %s23, 8
      %p216 = pnand %p214, %p215
      %p217 = pneg %p216
      // Predicated region
      $region9: #{tpu_custom_call.1} parent=5 // pred_check
        _
      $region10: #{tpu_custom_call.1} parent=5 // pred_check_branch
        %219 = sbr.rel (%p216) target = $region12
      $region11: #{tpu_custom_call.1} parent=5 // pred_region
        %s220 = ssub.s32 %s23, 1
      $region12: #{tpu_custom_call.1} parent=5 // pred_fallthru
        _
      %p221 = scmp.lt.s32.totalorder %s23, 7
      // Predicated region
      $region13: #{tpu_custom_call.1} parent=5 // pred_check
        %p222 = pneg %p221
      $region14: #{tpu_custom_call.1} parent=5 // pred_check_branch
        %224 = sbr.rel (%p222) target = $region16
      $region15: #{tpu_custom_call.1} parent=5 // pred_region
        // Predicated region
        $region17: #{tpu_custom_call.1} parent=15 // pred_check
          %p225 = pneg %p66
        $region18: #{tpu_custom_call.1} parent=15 // pred_check_branch
          %227 = sbr.rel (%p225) target = $region20
        $region19: #{tpu_custom_call.1} parent=15 // pred_region
          %s228 = sand.u32 %s56, 1
          %s229 = scalar_lea.sflag [#allocation4], %s228
          %s230 = sand.u32 %s56, 1
          %s231 = smul.addr %s230, 4
          %s232 = scalar_lea.vmem [#allocation3], %s231
          %s234 = ssub.s32 64, 64
          %235 = vsyncadd %s229, %s234
          %s236 = sadd.s32 %s32, %s31
          %s237 = sadd.s32 %s236, %s30
          %s238 = smul.addr %s237, 64
          %s239 = scalar_lea.hbm %s0, %s238
          %s241 = sshll.u32 %s232, 4
          %s242 = int_to_ptr.vmem [resolvable:$true] %s241
          %244 = dma.hbm_to_vmem [thread:$0]  %s239, 64, %s242, %s229
        $region20: #{tpu_custom_call.1} parent=15 // pred_fallthru
          _
        // Predicated region
        $region21: #{tpu_custom_call.1} parent=15 // pred_check
          %p245 = pneg %p94
        $region22: #{tpu_custom_call.1} parent=15 // pred_check_branch
          %247 = sbr.rel (%p245) target = $region24
        $region23: #{tpu_custom_call.1} parent=15 // pred_region
          %s248 = sand.u32 %s23, 1
          %s249 = scalar_lea.sflag [#allocation7], %s248
          %s250 = sand.u32 %s84, 1
          %s251 = smul.addr %s250, 128
          %s252 = scalar_lea.vmem [#allocation6], %s251
          %s253 = smul.u32 16, %s32
          %s255 = ssub.s32 2048, 2048
          %256 = vsyncadd %s249, %s255
          %s257 = smul.addr %s253, 2
          %s258 = smul.addr %s30, 32
          %s259 = sadd.s32 %s257, %s258
          %s260 = smul.addr %s259, 64
          %s261 = scalar_lea.hbm %s1, %s260
          %s262 = sshll.u32 %s252, 4
          %s263 = int_to_ptr.vmem [resolvable:$true] %s262
          %268 = dma.hbm_to_vmem [thread:$0]  %s261, 2048, %s263, %s249, 128, 128, 8
        $region24: #{tpu_custom_call.1} parent=15 // pred_fallthru
          _
        // Predicated region
        $region25: #{tpu_custom_call.1} parent=15 // pred_check
          %p269 = pneg %p120
        $region26: #{tpu_custom_call.1} parent=15 // pred_check_branch
          %271 = sbr.rel (%p269) target = $region28
        $region27: #{tpu_custom_call.1} parent=15 // pred_region
          %s272 = sand.u32 %s23, 1
          %s273 = scalar_lea.sflag [#allocation7], %s272
          %s274 = sand.u32 %s110, 1
          %s275 = smul.addr %s274, 2
          %s276 = scalar_lea.vmem [#allocation8], %s275
          %s278 = ssub.s32 32, 32
          %279 = vsyncadd %s273, %s278
          %s280 = smul.addr %s30, 2
          %s281 = smul.addr %s280, 16
          %s282 = scalar_lea.hbm %s2, %s281
          %s284 = sshll.u32 %s276, 4
          %s285 = int_to_ptr.vmem [resolvable:$true] %s284
          %287 = dma.hbm_to_vmem [thread:$0]  %s282, 32, %s285, %s273
        $region28: #{tpu_custom_call.1} parent=15 // pred_fallthru
          _
        // Predicated region
        $region29: #{tpu_custom_call.1} parent=15 // pred_check
          %p288 = pneg %p146
        $region30: #{tpu_custom_call.1} parent=15 // pred_check_branch
          %290 = sbr.rel (%p288) target = $region32
        $region31: #{tpu_custom_call.1} parent=15 // pred_region
          %s291 = sand.u32 %s23, 1
          %s292 = scalar_lea.sflag [#allocation10], %s291
          %s293 = sand.u32 %s136, 1
          %s294 = smul.addr %s293, 2
          %s295 = scalar_lea.vmem [#allocation9], %s294
          %s297 = ssub.s32 32, 32
          %298 = vsyncadd %s292, %s297
          %s299 = smul.addr %s30, 2
          %s300 = smul.addr %s299, 16
          %s301 = scalar_lea.hbm %s3, %s300
          %s303 = sshll.u32 %s295, 4
          %s304 = int_to_ptr.vmem [resolvable:$true] %s303
          %306 = dma.hbm_to_vmem [thread:$0]  %s301, 32, %s304, %s292
        $region32: #{tpu_custom_call.1} parent=15 // pred_fallthru
          _
        // Predicated region
        $region33: #{tpu_custom_call.1} parent=15 // pred_check
          %p307 = pneg %p172
        $region34: #{tpu_custom_call.1} parent=15 // pred_check_branch
          %309 = sbr.rel (%p307) target = $region36
        $region35: #{tpu_custom_call.1} parent=15 // pred_region
          %s310 = sand.u32 %s23, 1
          %s311 = scalar_lea.sflag [#allocation10], %s310
          %s312 = sand.u32 %s162, 1
          %s313 = smul.addr %s312, 2
          %s314 = scalar_lea.vmem [#allocation11], %s313
          %s316 = ssub.s32 32, 32
          %317 = vsyncadd %s311, %s316
          %s318 = smul.addr %s30, 2
          %s319 = smul.addr %s318, 16
          %s320 = scalar_lea.hbm %s4, %s319
          %s322 = sshll.u32 %s314, 4
          %s323 = int_to_ptr.vmem [resolvable:$true] %s322
          %325 = dma.hbm_to_vmem [thread:$0]  %s320, 32, %s323, %s311
        $region36: #{tpu_custom_call.1} parent=15 // pred_fallthru
          _
      $region16: #{tpu_custom_call.1} parent=5 // pred_fallthru
        _
      %p326 = scmp.le.s32.totalorder 1, %s23
      %p327 = scmp.lt.s32.totalorder %s23, 8
      %p328 = pnand %p326, %p327
      %p329 = pneg %p328
      // Predicated region
      $region37: #{tpu_custom_call.1} parent=5 // pred_check
        _
      $region38: #{tpu_custom_call.1} parent=5 // pred_check_branch
        %331 = sbr.rel (%p328) target = $region40
      $region39: #{tpu_custom_call.1} parent=5 // pred_region
        %s332 = ssub.s32 %s23, 1
        %s333 = sand.u32 %s59, 1
        %s334 = scalar_lea.sflag [#allocation4], %s333
        %s335 = sand.u32 %s59, 1
        %s336 = smul.addr %s335, 4
        %s337 = scalar_lea.vmem [#allocation3], %s336
        // Predicated region
        $region41: #{tpu_custom_call.1} parent=39 // pred_check
          %p338 = pneg %p72
        $region42: #{tpu_custom_call.1} parent=39 // pred_check_branch
          %340 = sbr.rel (%p338) target = $region44
        $region43: #{tpu_custom_call.1} parent=39 // pred_region
          %341 = dma.done %s334, 64
        $region44: #{tpu_custom_call.1} parent=39 // pred_fallthru
          _
        %s342 = sand.u32 %s28, 1
        %s343 = scalar_lea.sflag [#allocation7], %s342
        %s344 = sand.u32 %s87, 1
        %s345 = smul.addr %s344, 128
        %s346 = scalar_lea.vmem [#allocation6], %s345
        // Predicated region
        $region45: #{tpu_custom_call.1} parent=39 // pred_check
          %p347 = pneg %p100
        $region46: #{tpu_custom_call.1} parent=39 // pred_check_branch
          %349 = sbr.rel (%p347) target = $region48
        $region47: #{tpu_custom_call.1} parent=39 // pred_region
          %350 = dma.done %s343, 2048
        $region48: #{tpu_custom_call.1} parent=39 // pred_fallthru
          _
        %s351 = sand.u32 %s28, 1
        %s352 = scalar_lea.sflag [#allocation7], %s351
        %s353 = sand.u32 %s113, 1
        %s354 = smul.addr %s353, 2
        %s355 = scalar_lea.vmem [#allocation8], %s354
        // Predicated region
        $region49: #{tpu_custom_call.1} parent=39 // pred_check
          %p356 = pneg %p126
        $region50: #{tpu_custom_call.1} parent=39 // pred_check_branch
          %358 = sbr.rel (%p356) target = $region52
        $region51: #{tpu_custom_call.1} parent=39 // pred_region
          %359 = dma.done %s352, 32
        $region52: #{tpu_custom_call.1} parent=39 // pred_fallthru
          _
        %s360 = sand.u32 %s28, 1
        %s361 = scalar_lea.sflag [#allocation10], %s360
        %s362 = sand.u32 %s139, 1
        %s363 = smul.addr %s362, 2
        %s364 = scalar_lea.vmem [#allocation9], %s363
        // Predicated region
        $region53: #{tpu_custom_call.1} parent=39 // pred_check
          %p365 = pneg %p152
        $region54: #{tpu_custom_call.1} parent=39 // pred_check_branch
          %367 = sbr.rel (%p365) target = $region56
        $region55: #{tpu_custom_call.1} parent=39 // pred_region
          %368 = dma.done %s361, 32
        $region56: #{tpu_custom_call.1} parent=39 // pred_fallthru
          _
        %s369 = sand.u32 %s28, 1
        %s370 = scalar_lea.sflag [#allocation10], %s369
        %s371 = sand.u32 %s165, 1
        %s372 = smul.addr %s371, 2
        %s373 = scalar_lea.vmem [#allocation11], %s372
        // Predicated region
        $region57: #{tpu_custom_call.1} parent=39 // pred_check
          %p374 = pneg %p178
        $region58: #{tpu_custom_call.1} parent=39 // pred_check_branch
          %376 = sbr.rel (%p374) target = $region60
        $region59: #{tpu_custom_call.1} parent=39 // pred_region
          %377 = dma.done %s370, 32
        $region60: #{tpu_custom_call.1} parent=39 // pred_fallthru
          _
        %s378 = sand.u32 %s59, 1
        %s379 = scalar_lea.sflag [#allocation4], %s378
        %s380 = sand.u32 %s59, 1
        %s381 = smul.addr %s380, 4
        %s382 = scalar_lea.vmem [#allocation3], %s381
        %p383 = pneg %p72
        %p384 = pneg %p69
        %s385 = sand.u32 %s28, 1
        %s386 = scalar_lea.sflag [#allocation7], %s385
        %s387 = sand.u32 %s87, 1
        %s388 = smul.addr %s387, 128
        %s389 = scalar_lea.vmem [#allocation6], %s388
        %p390 = pneg %p100
        %p391 = pneg %p97
        %s392 = sand.u32 %s28, 1
        %s393 = scalar_lea.sflag [#allocation7], %s392
        %s394 = sand.u32 %s113, 1
        %s395 = smul.addr %s394, 2
        %s396 = scalar_lea.vmem [#allocation8], %s395
        %p397 = pneg %p126
        %p398 = pneg %p123
        %s399 = sand.u32 %s28, 1
        %s400 = scalar_lea.sflag [#allocation10], %s399
        %s401 = sand.u32 %s139, 1
        %s402 = smul.addr %s401, 2
        %s403 = scalar_lea.vmem [#allocation9], %s402
        %p404 = pneg %p152
        %p405 = pneg %p149
        %s406 = sand.u32 %s28, 1
        %s407 = scalar_lea.sflag [#allocation10], %s406
        %s408 = sand.u32 %s165, 1
        %s409 = smul.addr %s408, 2
        %s410 = scalar_lea.vmem [#allocation11], %s409
        %p411 = pneg %p178
        %p412 = pneg %p175
        %p413 = pneg %p206
        %p414 = pneg %p203
        %s415 = sand.u32 %s193, 1
        %s416 = scalar_lea.sflag [#allocation5], %s415
        %s417 = sand.u32 %s193, 1
        %s418 = smul.addr %s417, 8
        %s419 = scalar_lea.vmem [#allocation12], %s418
        %s420 = smul.u32 16, %s35
        %s421 = smul.u32 2, %s33
        %p423 = scmp.eq.s32.totalorder %s35, 0
        // Predicated region
        $region61: #{tpu_custom_call.1} parent=39 // pred_check
          %p424 = pneg %p423
        $region62: #{tpu_custom_call.1} parent=39 // pred_check_branch
          %426 = sbr.rel (%p424) target = $region64
        $region63: #{tpu_custom_call.1} parent=39 // pred_region
          %427 = vst [vmem:[#allocation2] sm:$0xff] 0.0
          %428 = vst [vmem:[#allocation2 + $0x8] sm:$0xff] 0.0
        $region64: #{tpu_custom_call.1} parent=39 // pred_fallthru
          _
        %v429 = vld [vmem:[#allocation2] sm:$0xff]
        %v430 = vld [vmem:[#allocation2 + $0x8] sm:$0xff]
        %v431 = vld [vmem:[%s337] sm:$0xf]
        %v432 = vld [vmem:[%s346] sm:$0xff]
        %v433 = vld [vmem:[%s346 + $0x8] sm:$0xff]
        %v434 = vld [vmem:[%s346 + $0x10] sm:$0xff]
        %v435 = vld [vmem:[%s346 + $0x18] sm:$0xff]
        %v436 = vld [vmem:[%s346 + $0x20] sm:$0xff]
        %v437 = vld [vmem:[%s346 + $0x28] sm:$0xff]
        %v438 = vld [vmem:[%s346 + $0x30] sm:$0xff]
        %v439 = vld [vmem:[%s346 + $0x38] sm:$0xff]
        %v440 = vld [vmem:[%s346 + $0x40] sm:$0xff]
        %v441 = vld [vmem:[%s346 + $0x48] sm:$0xff]
        %v442 = vld [vmem:[%s346 + $0x50] sm:$0xff]
        %v443 = vld [vmem:[%s346 + $0x58] sm:$0xff]
        %v444 = vld [vmem:[%s346 + $0x60] sm:$0xff]
        %v445 = vld [vmem:[%s346 + $0x68] sm:$0xff]
        %v446 = vld [vmem:[%s346 + $0x70] sm:$0xff]
        %v447 = vld [vmem:[%s346 + $0x78] sm:$0xff]
        %v464 = vunpack.c.l.b16 %v432
        %v465 = vunpack.c.h.b16 %v432
        %v466 = vunpack.c.l.b16 %v433
        %v467 = vunpack.c.h.b16 %v433
        %v468 = vunpack.c.l.b16 %v434
        %v469 = vunpack.c.h.b16 %v434
        %v470 = vunpack.c.l.b16 %v435
        %v471 = vunpack.c.h.b16 %v435
        %v472 = vunpack.c.l.b16 %v436
        %v473 = vunpack.c.h.b16 %v436
        %v474 = vunpack.c.l.b16 %v437
        %v475 = vunpack.c.h.b16 %v437
        %v476 = vunpack.c.l.b16 %v438
        %v477 = vunpack.c.h.b16 %v438
        %v478 = vunpack.c.l.b16 %v439
        %v479 = vunpack.c.h.b16 %v439
        %v480 = vunpack.c.l.b16 %v440
        %v481 = vunpack.c.h.b16 %v440
        %v482 = vunpack.c.l.b16 %v441
        %v483 = vunpack.c.h.b16 %v441
        %v484 = vunpack.c.l.b16 %v442
        %v485 = vunpack.c.h.b16 %v442
        %v486 = vunpack.c.l.b16 %v443
        %v487 = vunpack.c.h.b16 %v443
        %v488 = vunpack.c.l.b16 %v444
        %v489 = vunpack.c.h.b16 %v444
        %v490 = vunpack.c.l.b16 %v445
        %v491 = vunpack.c.h.b16 %v445
        %v492 = vunpack.c.l.b16 %v446
        %v493 = vunpack.c.h.b16 %v446
        %v494 = vunpack.c.l.b16 %v447
        %v495 = vunpack.c.h.b16 %v447
        %v496 = vpack.c.b16 %v466, %v464
        %v497 = vpack.c.b16 %v467, %v465
        %v498 = vpack.c.b16 %v470, %v468
        %v499 = vpack.c.b16 %v471, %v469
        %v500 = vpack.c.b16 %v474, %v472
        %v501 = vpack.c.b16 %v475, %v473
        %v502 = vpack.c.b16 %v478, %v476
        %v503 = vpack.c.b16 %v479, %v477
        %v504 = vpack.c.b16 %v482, %v480
        %v505 = vpack.c.b16 %v483, %v481
        %v506 = vpack.c.b16 %v486, %v484
        %v507 = vpack.c.b16 %v487, %v485
        %v508 = vpack.c.b16 %v490, %v488
        %v509 = vpack.c.b16 %v491, %v489
        %v510 = vpack.c.b16 %v494, %v492
        %v511 = vpack.c.b16 %v495, %v493
        %528 = vmatprep.subr.bf16.mxu0 %v511
        %529 = vmatpush1.bf16.msra.mxu0 %v510
        %530 = vmatprep.subr.bf16.mxu0 %v509
        %531 = vmatpush1.bf16.msra.mxu0 %v508
        %532 = vmatprep.subr.bf16.mxu0 %v507
        %533 = vmatpush1.bf16.msra.mxu0 %v506
        %534 = vmatprep.subr.bf16.mxu0 %v505
        %535 = vmatpush1.bf16.msra.mxu0 %v504
        %536 = vmatprep.subr.bf16.mxu0 %v503
        %537 = vmatpush1.bf16.msra.mxu0 %v502
        %538 = vmatprep.subr.bf16.mxu0 %v501
        %539 = vmatpush1.bf16.msra.mxu0 %v500
        %540 = vmatprep.subr.bf16.mxu0 %v499
        %541 = vmatpush1.bf16.msra.mxu0 %v498
        %542 = vmatprep.subr.bf16.mxu0 %v497
        %543 = vmatpush1.bf16.msra.mxu0 %v496
        %544 = vmatprep.subr.bf16.mxu0 0
        %545 = vmatpush2.bf16.msra.mxu0 0
        %546 = vmatprep.subr.bf16.mxu0 0
        %547 = vmatpush2.bf16.msra.mxu0 0
        %548 = vmatprep.subr.bf16.mxu0 0
        %549 = vmatpush2.bf16.msra.mxu0 0
        %550 = vmatprep.subr.bf16.mxu0 0
        %551 = vmatpush2.bf16.msra.mxu0 0
        %552 = vmatprep.subr.bf16.mxu0 0
        %553 = vmatpush2.bf16.msra.mxu0 0
        %554 = vmatprep.subr.bf16.mxu0 0
        %555 = vmatpush2.bf16.msra.mxu0 0
        %556 = vmatprep.subr.bf16.mxu0 0
        %557 = vmatpush2.bf16.msra.mxu0 0
        %558 = vmatprep.subr.bf16.mxu0 0
        %559 = vmatpush2.bf16.msra.mxu0 0
        %560 = vmatprep.mubr.bf16.mxu0 0
        %561 = vmatmul.mubr.bf16.gmra.mxu0 %v431
        %v562 = vpop.f32.mrf.mxu0
        %v563 = vadd.f32 0.0, %v562
        %v564 = vpop.f32.mrf.mxu0
        %v565 = vadd.f32 0.0, %v564
        %v566 = vpop.f32.mrf.mxu0
        %v567 = vpop.f32.mrf.mxu0
        %568 = vdwg.mxu0
        %v569 = vadd.f32 %v429, %v563
        %v570 = vadd.f32 %v430, %v565
        %571 = vst [vmem:[#allocation2] sm:$0xff] %v569
        %572 = vst [vmem:[#allocation2 + $0x8] sm:$0xff] %v570
        // Predicated region
        $region65: #{tpu_custom_call.1} parent=39 // pred_check
          %p573 = pneg %p423
        $region66: #{tpu_custom_call.1} parent=39 // pred_check_branch
          %575 = sbr.rel (%p573) target = $region68
        $region67: #{tpu_custom_call.1} parent=39 // pred_region
          %v576 = vld [vmem:[#allocation2] sm:$0xff]
          %v577 = vld [vmem:[#allocation2 + $0x8] sm:$0xff]
          %v578 = vld [vmem:[%s355] sm:$0x3]
          %v580 = vlaneseq
          %v581 = vshrl.u32 %v580, 7
          %v582 = vsub.s32 0, %v581
          %v583 = vrot.slane %v578, %v582
          %v584 = vlaneseq
          %v585 = vshrl.u32 %v584, 7
          %v586 = vsub.s32 1, %v585
          %v587 = vrot.slane %v578, %v586
          %v590 = vadd.f32 %v576, %v583
          %v591 = vadd.f32 %v577, %v587
          %v592 = vadd.f32 %v590, %v591
          %593 = vadd.xlane.f32.xlu0 %v592
          %v594 = vpop.xlane.xlu0 %593
          %v595 = vrcp.pop 256.0
          %v596 = vmul.f32 %v594, %v595
          %v597 = vmul.f32 %v590, %v590
          %v598 = vmul.f32 %v591, %v591
          %v599 = vadd.f32 %v597, %v598
          %600 = vadd.xlane.f32.xlu0 %v599
          %v601 = vpop.xlane.xlu0 %600
          %v602 = vmul.f32 %v601, %v595
          %v603 = vmul.f32 %v596, %v596
          %v604 = vsub.f32 %v602, %v603
          %v605 = vsub.f32 %v590, %v596
          %v606 = vsub.f32 %v591, %v596
          %v607 = vadd.f32 %v604, 1e-05
          %v608 = vrsqrt.pop %v607
          %v609 = vmul.f32 %v605, %v608
          %v610 = vmul.f32 %v606, %v608
          %v611 = vld [vmem:[%s364] sm:$0x3]
          %v613 = vlaneseq
          %v614 = vshrl.u32 %v613, 7
          %v615 = vsub.s32 0, %v614
          %v616 = vrot.slane %v611, %v615
          %v617 = vlaneseq
          %v618 = vshrl.u32 %v617, 7
          %v619 = vsub.s32 1, %v618
          %v620 = vrot.slane %v611, %v619
          %v623 = vmul.f32 %v609, %v616
          %v624 = vmul.f32 %v610, %v620
          %v625 = vld [vmem:[%s373] sm:$0x3]
          %v627 = vlaneseq
          %v628 = vshrl.u32 %v627, 7
          %v629 = vsub.s32 0, %v628
          %v630 = vrot.slane %v625, %v629
          %v631 = vlaneseq
          %v632 = vshrl.u32 %v631, 7
          %v633 = vsub.s32 1, %v632
          %v634 = vrot.slane %v625, %v633
          %v637 = vadd.f32 %v623, %v630
          %v638 = vadd.f32 %v624, %v634
          %v639 = vxor.u32 %v637, 2147483648
          %v640 = vxor.u32 %v638, 2147483648
          %v641 = vmul.f32 %v639, 1.442695
          %v642 = vpow.pop %v641
          %v643 = vmul.f32 %v640, 1.442695
          %v644 = vpow.pop %v643
          %v645 = vadd.f32 %v642, 1.0
          %v646 = vadd.f32 %v644, 1.0
          %v647 = vrcp.pop %v645
          %v648 = vmul.f32 1.0, %v647
          %v649 = vrcp.pop %v646
          %v650 = vmul.f32 1.0, %v649
          %v651 = vpack.c.bf16 %v648, %v648
          %v652 = vpack.c.bf16 %v650, %v650
          %v655 = vunpack.c.l.b16 %v651
          %v656 = vunpack.c.l.b16 %v652
          %v657 = vpack.c.b16 %v656, %v655
          %659 = vst [vmem:[%s419] sm:$0xff] %v657
        $region68: #{tpu_custom_call.1} parent=39 // pred_fallthru
          _
        %s660 = sand.u32 %s193, 1
        %s661 = scalar_lea.sflag [#allocation5], %s660
        %s662 = sand.u32 %s193, 1
        %s663 = smul.addr %s662, 8
        %s664 = scalar_lea.vmem [#allocation12], %s663
        // Predicated region
        $region69: #{tpu_custom_call.1} parent=39 // pred_check
          %p665 = pneg %p203
        $region70: #{tpu_custom_call.1} parent=39 // pred_check_branch
          %667 = sbr.rel (%p665) target = $region72
        $region71: #{tpu_custom_call.1} parent=39 // pred_region
          %s668 = smul.u32 2, %s33
          %s670 = ssub.s32 128, 128
          %671 = vsyncadd %s661, %s670
          %s672 = smul.addr %s34, 14
          %s673 = sadd.s32 %s668, %s672
          %s674 = smul.addr %s673, 64
          %s675 = scalar_lea.hbm %s5, %s674
          %s677 = sshll.u32 %s664, 4
          %s678 = int_to_ptr.vmem [resolvable:$true] %s677
          %680 = dma.vmem_to_hbm [thread:$0]  %s678, 128, %s675, %s661
        $region72: #{tpu_custom_call.1} parent=39 // pred_fallthru
          _
      $region40: #{tpu_custom_call.1} parent=5 // pred_fallthru
        _
      %p681 = scmp.le.s32.totalorder 2, %s23
      // Predicated region
      $region73: #{tpu_custom_call.1} parent=5 // pred_check
        %p682 = pneg %p681
      $region74: #{tpu_custom_call.1} parent=5 // pred_check_branch
        %684 = sbr.rel (%p682) target = $region76
      $region75: #{tpu_custom_call.1} parent=5 // pred_region
        %s685 = ssub.s32 %s23, 2
        // Predicated region
        $region77: #{tpu_custom_call.1} parent=75 // pred_check
          %p686 = pneg %p209
        $region78: #{tpu_custom_call.1} parent=75 // pred_check_branch
          %688 = sbr.rel (%p686) target = $region80
        $region79: #{tpu_custom_call.1} parent=75 // pred_region
          %s689 = sand.u32 %s194, 1
          %s690 = scalar_lea.sflag [#allocation5], %s689
          %s691 = sand.u32 %s194, 1
          %s692 = smul.addr %s691, 8
          %s693 = scalar_lea.vmem [#allocation12], %s692
          %694 = dma.done %s690, 128
        $region80: #{tpu_custom_call.1} parent=75 // pred_fallthru
          _
      $region76: #{tpu_custom_call.1} parent=5 // pred_fallthru
        _
    $region6: #{tpu_custom_call.1} parent=1 // loop_footer
      %s27 = sadd.s32 1, %s23
    $region7: #{tpu_custom_call.1} parent=1 // loop_footer_branch
      %22 = sbr.rel target = $region3
    $region8: #{tpu_custom_call.1} parent=1 // loop_exit
      _
    %695 = vsyncpa [#allocation4], 1
    %s696 = scalar_lea.sflag [#allocation4], 1
    %697 = vsyncpa %s696, 1
    %698 = vsyncpa [#allocation7], 1
    %s699 = scalar_lea.sflag [#allocation7], 1
    %700 = vsyncpa %s699, 1
    %701 = vsyncpa [#allocation10], 1
    %s702 = scalar_lea.sflag [#allocation10], 1
    %703 = vsyncpa %s702, 1
    %704 = vsyncpa [#allocation5], 1
    %s705 = scalar_lea.sflag [#allocation5], 1
    %706 = vsyncpa %s705, 1

</llo_original>
